<compile_context>
chip_gen: v6e
topology: v6e:2x2x1
jax: 0.10.0
libtpu: 0.0.40
codegen_flags: <defaults>
</compile_context>

<pallas_src>
import functools

import jax
import jax.numpy as jnp
from jax.experimental import pallas as pl
from jax.experimental.pallas import tpu as pltpu


def _channel_attention_kernel(x_ref, w1t_ref, w2t_ref, o_ref, *, hw, chunk=512):
    # x_ref:   (Bt, C, HW)  input slab for this grid step
    # w1t_ref: (C, Cr)      transpose of Conv2d(C -> Cr) 1x1 weight
    # w2t_ref: (Cr, C)      transpose of Conv2d(Cr -> C) 1x1 weight
    bt, c = x_ref.shape[0], x_ref.shape[1]

    # ---- Pooled avg/max over the flattened spatial (lane) axis -------------
    # Chunked so only a (bt, c, chunk) temporary is ever live (avoids a
    # full-slab f32 copy on low-precision inputs).
    n_full = hw // chunk
    rem = hw - n_full * chunk

    sum0 = jnp.zeros((bt, c), jnp.float32)
    max0 = jnp.full((bt, c), -jnp.inf, jnp.float32)

    def body(i, carry):
        s, m = carry
        off = pl.multiple_of(i * chunk, chunk)
        xc = x_ref[:, :, pl.ds(off, chunk)]                     # (bt, c, chunk)
        s = s + jnp.sum(xc, axis=2, dtype=jnp.float32)
        m = jnp.maximum(m, jnp.max(xc, axis=2).astype(jnp.float32))
        return s, m

    if n_full > 0:
        s, m = jax.lax.fori_loop(0, n_full, body, (sum0, max0))
    else:
        s, m = sum0, max0
    if rem > 0:
        xt = x_ref[:, :, pl.ds(n_full * chunk, rem)]            # (bt, c, rem)
        s = s + jnp.sum(xt, axis=2, dtype=jnp.float32)
        m = jnp.maximum(m, jnp.max(xt, axis=2).astype(jnp.float32))

    avg = s * (1.0 / hw)                                        # (bt, c) f32

    # ---- Shared 1x1-conv MLP ------------------------------------------------
    # Second layer is linear (no bias), so fc(avg)+fc(max) ==
    # (relu(avg@W1ᵀ) + relu(max@W1ᵀ)) @ W2ᵀ.  Feed MXU operands in the
    # weights' native dtype; accumulate in f32.
    w1t = w1t_ref[...]
    h = (jnp.maximum(jnp.dot(avg.astype(w1t.dtype), w1t,
                             preferred_element_type=jnp.float32), 0.0)
         + jnp.maximum(jnp.dot(m.astype(w1t.dtype), w1t,
                               preferred_element_type=jnp.float32), 0.0))
    out = jnp.dot(h.astype(w2t_ref.dtype), w2t_ref[...],
                  preferred_element_type=jnp.float32)           # (bt, c) f32

    # ---- Gate: broadcast sigmoid over HW, multiply in the input dtype ------
    scale = jax.nn.sigmoid(out).astype(x_ref.dtype)[:, :, None]  # (bt, c, 1)
    o_ref[...] = (x_ref[...] * scale).astype(o_ref.dtype)


def _vmem_limit_bytes():
    """Generation-aware scoped-VMEM limit (~85% of physical capacity)."""
    cap = None
    try:
        cap = int(pltpu.get_tpu_info().vmem_capacity_bytes)
    except Exception:
        cap = None
    if not cap or cap <= 0:
        cap = 64 * 1024 * 1024          # conservative (v7x-sized) fallback
    limit = int(cap * 0.85)             # ≈108 MiB on 128 MiB parts, ≈54 MiB on 64 MiB
    return max(32 * 1024 * 1024, min(limit, 112 * 1024 * 1024))


def _pick_batch_tile(B, slab_bytes, budget_bytes):
    """Pick (Bt, buffer_count) for the x/out slabs.

    Bt is a divisor of B such that the double-buffered in+out footprint
    (4 * Bt * slab) fits the budget.  Among fitting tiles, prefer >= 4 grid
    steps (>= 2 per TensorCore on dual-TC parts), then >= 2, as long as the
    per-step block stays large enough that per-step overhead is negligible.
    If even Bt=1 cannot be double-buffered, drop to single buffering.
    """
    divisors = [d for d in range(1, B + 1) if B % d == 0]          # ascending
    fitting = [d for d in divisors if 4 * d * slab_bytes <= budget_bytes]
    if not fitting:
        # Even one batch element cannot be double-buffered (in+out): use
        # single-buffered pipelining (2 live slabs instead of 4).
        # TODO(synk): for slabs that do not fit even single-buffered, a
        # two-pass formulation (pooled-stats kernel + tiled gating kernel)
        # would be required.
        return 1, 1
    fit = fitting[-1]
    min_block = min(1 << 20, max(slab_bytes, (fit * slab_bytes) // 2))
    for target_steps in (4, 2):
        cands = [d for d in fitting
                 if B // d >= target_steps and d * slab_bytes >= min_block]
        if cands:
            return cands[-1], 2
    return fit, 2


def channel_attention(x, w1, w2, *, vmem_limit_bytes=None):
    """x: (B, C, H, W); w1: (Cr, C); w2: (C, Cr). Returns (B, C, H, W)."""
    B, C, H, W = x.shape
    Cr = w1.shape[0]
    HW = H * W

    x_flat = x.reshape(B, C, HW)
    w1t = jnp.asarray(w1).T          # (C, Cr) — transposed once, outside the kernel
    w2t = jnp.asarray(w2).T          # (Cr, C)

    if vmem_limit_bytes is None:
        vmem_limit_bytes = _vmem_limit_bytes()

    itemsize = jnp.dtype(x.dtype).itemsize
    slab = C * HW * itemsize
    # Headroom inside the scoped limit for weights, pooled/MLP temporaries,
    # chunk-sized reduction temporaries and compiler internals.
    block_budget = int(0.80 * vmem_limit_bytes)
    Bt, buffers = _pick_batch_tile(B, slab, block_budget)
    grid = (B // Bt,)

    kernel = functools.partial(_channel_attention_kernel, hw=HW)

    xo_kwargs = {}
    if buffers == 1:
        xo_kwargs = dict(pipeline_mode=pl.Buffered(1))
    x_spec = pl.BlockSpec((Bt, C, HW), lambda b: (b, 0, 0), **xo_kwargs)
    out_spec = pl.BlockSpec((Bt, C, HW), lambda b: (b, 0, 0), **xo_kwargs)

    out_flat = pl.pallas_call(
        kernel,
        out_shape=jax.ShapeDtypeStruct((B, C, HW), x.dtype),
        grid_spec=pltpu.PrefetchScalarGridSpec(
            num_scalar_prefetch=0,
            grid=grid,
            in_specs=[
                x_spec,
                pl.BlockSpec((C, Cr), lambda b: (0, 0)),
                pl.BlockSpec((Cr, C), lambda b: (0, 0)),
            ],
            out_specs=out_spec,
        ),
        compiler_params=pltpu.CompilerParams(
            dimension_semantics=("parallel",),
            vmem_limit_bytes=int(vmem_limit_bytes),
        ),
    )(x_flat, w1t, w2t)

    return out_flat.reshape(B, C, H, W)


def channel_attention_ref(x, w1, w2):
    """Pure-JAX reference mirroring the PyTorch module."""
    avg = jnp.mean(x, axis=(2, 3))                      # (B, C)
    mx = jnp.max(x, axis=(2, 3))                        # (B, C)

    def fc(p):                                          # p: (B, C)
        h = jnp.maximum(p @ w1.T, 0.0)                  # (B, Cr)
        return h @ w2.T                                 # (B, C)

    out = fc(avg) + fc(mx)                              # (B, C)
    scale = jax.nn.sigmoid(out)[:, :, None, None]       # (B, C, 1, 1)
    return x * scale


if __name__ == "__main__":
    key = jax.random.PRNGKey(0)
    B, C, H, W = 2, 32, 16, 16
    reduction = 8
    Cr = C // reduction

    kx, kw1, kw2 = jax.random.split(key, 3)
    x = jax.random.normal(kx, (B, C, H, W), dtype=jnp.float32)
    # 1x1-conv weights (bias=False), stored as (out_channels, in_channels)
    # with the 1x1 spatial dims squeezed out.
    w1 = jax.random.normal(kw1, (Cr, C), dtype=jnp.float32) * 0.1
    w2 = jax.random.normal(kw2, (C, Cr), dtype=jnp.float32) * 0.1

    y = jax.block_until_ready(channel_attention(x, w1, w2))
    y_ref = channel_attention_ref(x, w1, w2)

    assert y.shape == (B, C, H, W)
    assert jnp.allclose(y, y_ref, atol=1e-5, rtol=1e-5), "mismatch vs reference"

    print("KERNEL_OK")
</pallas_src>

<mosaic_0001>
module attributes {stable_mosaic.version = 11 : i64} {
  func.func @_channel_attention_kernel(%arg0: i32, %arg1: memref<1x32x256xf32, #tpu.memory_space<vmem>>, %arg2: memref<32x4xf32, #tpu.memory_space<vmem>>, %arg3: memref<4x32xf32, #tpu.memory_space<vmem>>, %arg4: memref<1x32x256xf32, #tpu.memory_space<vmem>>) attributes {dimension_semantics = [#tpu.dimension_semantics<parallel>], iteration_bounds = array<i64: 2>, scalar_prefetch = 0 : i64, scratch_operands = 0 : i64, tpu.core_type = #tpu.core_type<tc>, window_params = [{transform_indices = @transform_0, window_bounds = array<i64: 1, 32, 256>}, {pipeline_mode = #tpu.pipeline_mode<synchronous>, transform_indices = @transform_1, window_bounds = array<i64: 32, 4>}, {pipeline_mode = #tpu.pipeline_mode<synchronous>, transform_indices = @transform_2, window_bounds = array<i64: 4, 32>}, {transform_indices = @transform_3, window_bounds = array<i64: 1, 32, 256>}]} {
    %cst = arith.constant 0.000000e+00 : f32
    %0 = vector.broadcast %cst : f32 to vector<1x32xf32>
    %cst_0 = arith.constant 0xFF800000 : f32
    %1 = vector.broadcast %cst_0 : f32 to vector<1x32xf32>
    %c0 = arith.constant 0 : index
    %c0_1 = arith.constant 0 : index
    %c0_2 = arith.constant 0 : index
    %2 = vector.load %arg1[%c0, %c0_1, %c0_2] : memref<1x32x256xf32, #tpu.memory_space<vmem>>, vector<1x32x256xf32>
    %cst_3 = arith.constant dense<0.000000e+00> : vector<1x32xf32>
    %3 = vector.multi_reduction <add>, %2, %cst_3 [2] : vector<1x32x256xf32> to vector<1x32xf32>
    %4 = arith.addf %0, %3 : vector<1x32xf32>
    %cst_4 = arith.constant dense<0xFF800000> : vector<1x32xf32>
    %5 = vector.multi_reduction <maximumf>, %2, %cst_4 [2] : vector<1x32x256xf32> to vector<1x32xf32>
    %6 = arith.maximumf %1, %5 : vector<1x32xf32>
    %cst_5 = arith.constant 3.906250e-03 : f32
    %7 = vector.broadcast %cst_5 : f32 to vector<1x32xf32>
    %8 = arith.mulf %4, %7 : vector<1x32xf32>
    %c0_6 = arith.constant 0 : index
    %c0_7 = arith.constant 0 : index
    %9 = vector.load %arg2[%c0_6, %c0_7] : memref<32x4xf32, #tpu.memory_space<vmem>>, vector<32x4xf32>
    %cst_8 = arith.constant dense<0.000000e+00> : vector<1x4xf32>
    %10 = tpu.matmul %8, %9, %cst_8 {dimension_numbers = #tpu.dot_dimension_numbers<[1], [0], [0], [1], [0, 0, 1, 1], [], []>} : vector<1x32xf32>, vector<32x4xf32>, vector<1x4xf32> -> vector<1x4xf32>
    %cst_9 = arith.constant 0.000000e+00 : f32
    %11 = vector.broadcast %cst_9 : f32 to vector<1x4xf32>
    %12 = arith.maximumf %10, %11 : vector<1x4xf32>
    %cst_10 = arith.constant dense<0.000000e+00> : vector<1x4xf32>
    %13 = tpu.matmul %6, %9, %cst_10 {dimension_numbers = #tpu.dot_dimension_numbers<[1], [0], [0], [1], [0, 0, 1, 1], [], []>} : vector<1x32xf32>, vector<32x4xf32>, vector<1x4xf32> -> vector<1x4xf32>
    %cst_11 = arith.constant 0.000000e+00 : f32
    %14 = vector.broadcast %cst_11 : f32 to vector<1x4xf32>
    %15 = arith.maximumf %13, %14 : vector<1x4xf32>
    %16 = arith.addf %12, %15 : vector<1x4xf32>
    %c0_12 = arith.constant 0 : index
    %c0_13 = arith.constant 0 : index
    %17 = vector.load %arg3[%c0_12, %c0_13] : memref<4x32xf32, #tpu.memory_space<vmem>>, vector<4x32xf32>
    %cst_14 = arith.constant dense<0.000000e+00> : vector<1x32xf32>
    %18 = tpu.matmul %16, %17, %cst_14 {dimension_numbers = #tpu.dot_dimension_numbers<[1], [0], [0], [1], [0, 0, 1, 1], [], []>} : vector<1x4xf32>, vector<4x32xf32>, vector<1x32xf32> -> vector<1x32xf32>
    %19 = arith.negf %18 : vector<1x32xf32>
    %20 = math.exp %19 : vector<1x32xf32>
    %cst_15 = arith.constant 1.000000e+00 : f32
    %21 = vector.broadcast %cst_15 : f32 to vector<1x32xf32>
    %22 = arith.addf %21, %20 : vector<1x32xf32>
    %23 = arith.divf %21, %22 : vector<1x32xf32>
    %24 = vector.shape_cast %23 : vector<1x32xf32> to vector<1x32x1xf32>
    %c0_16 = arith.constant 0 : index
    %c0_17 = arith.constant 0 : index
    %c0_18 = arith.constant 0 : index
    %25 = vector.load %arg1[%c0_16, %c0_17, %c0_18] : memref<1x32x256xf32, #tpu.memory_space<vmem>>, vector<1x32x256xf32>
    %26 = vector.broadcast %24 : vector<1x32x1xf32> to vector<1x32x256xf32>
    %27 = arith.mulf %25, %26 : vector<1x32x256xf32>
    %c0_19 = arith.constant 0 : index
    %c0_20 = arith.constant 0 : index
    %c0_21 = arith.constant 0 : index
    %28 = vector.load %arg4[%c0_19, %c0_20, %c0_21] : memref<1x32x256xf32, #tpu.memory_space<vmem>>, vector<1x32x256xf32>
    tpu.vector_store %arg4[%c0_19, %c0_20, %c0_21], %27 {strides = array<i32>} : memref<1x32x256xf32, #tpu.memory_space<vmem>>, vector<1x32x256xf32>,
    return
  }
  func.func @transform_0(%arg0: i32) -> (i32, i32, i32) {
    %c0_i32 = arith.constant 0 : i32
    %c0_i32_0 = arith.constant 0 : i32
    %c0_i32_1 = arith.constant 0 : i32
    return %arg0, %c0_i32, %c0_i32_0 : i32, i32, i32
  }
  func.func @transform_1(%arg0: i32) -> (i32, i32) {
    %c0_i32 = arith.constant 0 : i32
    %c0_i32_0 = arith.constant 0 : i32
    %c0_i32_1 = arith.constant 0 : i32
    return %c0_i32, %c0_i32_0 : i32, i32
  }
  func.func @transform_2(%arg0: i32) -> (i32, i32) {
    %c0_i32 = arith.constant 0 : i32
    %c0_i32_0 = arith.constant 0 : i32
    %c0_i32_1 = arith.constant 0 : i32
    return %c0_i32, %c0_i32_0 : i32, i32
  }
  func.func @transform_3(%arg0: i32) -> (i32, i32, i32) {
    %c0_i32 = arith.constant 0 : i32
    %c0_i32_0 = arith.constant 0 : i32
    %c0_i32_1 = arith.constant 0 : i32
    return %arg0, %c0_i32, %c0_i32_0 : i32, i32, i32
  }
}

</mosaic_0001>

<llo_original>
// kernel: tpu_custom_call.1
$region0: #{tpu_custom_call.1}
  #allocation0 [shape = 'u32[]', space=smem, size = 0x4, offset = 0x4, fixed_abs, tag = 'smem constant byte address 0x4 - core index']
  #allocation1 [shape = 'u32[144,128]{1,0:T(1,128)}', space=vmem, size = 0x12000, scoped, tag = 'internal scratch']
  %s0 = inlined_call_operand.hbm [shape: f32[2,32,256], index: 0, kind: input, shape index: {}]
  %s1 = inlined_call_operand.vmem [shape: f32[32,4], index: 1, kind: input, shape index: {}]
  %s2 = inlined_call_operand.vmem [shape: f32[4,32], index: 2, kind: input, shape index: {}]
  %s3 = inlined_call_operand.hbm [shape: f32[2,32,256], index: 3, kind: output, shape index: {}]
  %s4 = sld [smem:[#allocation0]]
  $region49: #{tpu_custom_call.1} parent=0
    _
  %s6 = ssub.s32 1, %s4
  %s7 = scalar_select 0, %s6, %s4
  $region1: #{tpu_custom_call.1} parent=0
    #allocation2 [shape = 'u8[65536]{0}', space=vmem, size = 0x10000, scoped, tag = 'input window, operand 0']
    #allocation3 [shape = 's32[2]{0}', space=sflag, size = 0x8, scoped, tag = 'scoped memory for tpu_custom_call.1']
    #allocation4 [shape = 's32[2]{0}', space=sflag, size = 0x8, scoped, tag = 'scoped memory for tpu_custom_call.1']
    #allocation5 [shape = 'u8[65536]{0}', space=vmem, size = 0x10000, scoped, tag = 'output window, operand 0']
    %8 = vsyncpa [#allocation3], 0
    %s9 = scalar_lea.sflag [#allocation3], 1
    %10 = vsyncpa %s9, 0
    %11 = vsyncpa [#allocation4], 0
    %s12 = scalar_lea.sflag [#allocation4], 1
    %13 = vsyncpa %s12, 0
    loop: start=0, step=1, limit=4
    $region2: #{tpu_custom_call.1} parent=1 // loop_pre_header
      _
    $region3: #{tpu_custom_call.1} parent=1 // loop_header
      %s15 = sphi 0, %s19
      %p16 = scmp.ge.s32.totalorder %s15, 4
      %s25 = sphi 0, %s27
      %s28 = sphi 0, %s25
      %s29 = sphi 0, %s28
      %s45 = sphi 0, %s29
      %s49 = sphi 0, %s49
      %s51 = sphi 0, %s49
      %s52 = sphi 0, %s51
      %s66 = sphi 0, %s52
      %s70 = sphi 0, %s70
      %s72 = sphi 0, %s70
      %s73 = sphi 0, %s72
      %s87 = sphi 0, %s73
      %s93 = sphi 0, %s95
      %s96 = sphi 0, %s93
      %s97 = sphi 0, %s96
      %s113 = sphi 0, %s97
    $region4: #{tpu_custom_call.1} parent=1 // loop_header_branch
      %18 = sbr.rel (%p16) target = $region8
    $region5: #{tpu_custom_call.1} parent=1 // loop_body
      %s20 = ssub.s32 %s15, 1
      %s21 = ssub.s32 %s15, 2
      %s22 = sadd.s32 %s15, 1
      %s23 = ssub.s32 %s15, %s22
      %p24 = scmp.eq.s32.totalorder %s23, 0
      %s26 = sadd.s32 %s25, 1
      %s27 = scalar_select %p24, %s25, %s26
      %p30 = pneg %p24
      %p31 = scmp.eq.s32.totalorder %s15, 1
      %p32 = por %p30, %p31
      %p33 = scmp.ne.s32.totalorder %s25, %s28
      %p34 = scmp.eq.s32.totalorder %s15, 0
      %p35 = por %p33, %p34
      %p36 = scmp.ne.s32.totalorder %s25, %s28
      %p37 = scmp.eq.s32.totalorder %s20, 1
      %p38 = por %p36, %p37
      %p39 = scmp.ne.s32.totalorder %s28, %s29
      %p40 = scmp.eq.s32.totalorder %s20, 0
      %p41 = por %p39, %p40
      %p42 = scmp.ne.s32.totalorder %s28, %s29
      %p43 = scmp.eq.s32.totalorder %s21, 1
      %p44 = por %p42, %p43
      %p46 = scmp.ne.s32.totalorder %s29, %s45
      %p47 = scmp.eq.s32.totalorder %s21, 0
      %p48 = por %p46, %p47
      %s50 = sadd.s32 %s49, 1
      %p53 = scmp.eq.s32.totalorder %s15, 1
      %p54 = scmp.ne.s32.totalorder %s49, %s51
      %p55 = scmp.eq.s32.totalorder %s15, 0
      %p56 = por %p54, %p55
      %p57 = scmp.ne.s32.totalorder %s49, %s51
      %p58 = scmp.eq.s32.totalorder %s20, 1
      %p59 = por %p57, %p58
      %p60 = scmp.ne.s32.totalorder %s51, %s52
      %p61 = scmp.eq.s32.totalorder %s20, 0
      %p62 = por %p60, %p61
      %p63 = scmp.ne.s32.totalorder %s51, %s52
      %p64 = scmp.eq.s32.totalorder %s21, 1
      %p65 = por %p63, %p64
      %p67 = scmp.ne.s32.totalorder %s52, %s66
      %p68 = scmp.eq.s32.totalorder %s21, 0
      %p69 = por %p67, %p68
      %s71 = sadd.s32 %s70, 1
      %p74 = scmp.eq.s32.totalorder %s15, 1
      %p75 = scmp.ne.s32.totalorder %s70, %s72
      %p76 = scmp.eq.s32.totalorder %s15, 0
      %p77 = por %p75, %p76
      %p78 = scmp.ne.s32.totalorder %s70, %s72
      %p79 = scmp.eq.s32.totalorder %s20, 1
      %p80 = por %p78, %p79
      %p81 = scmp.ne.s32.totalorder %s72, %s73
      %p82 = scmp.eq.s32.totalorder %s20, 0
      %p83 = por %p81, %p82
      %p84 = scmp.ne.s32.totalorder %s72, %s73
      %p85 = scmp.eq.s32.totalorder %s21, 1
      %p86 = por %p84, %p85
      %p88 = scmp.ne.s32.totalorder %s73, %s87
      %p89 = scmp.eq.s32.totalorder %s21, 0
      %p90 = por %p88, %p89
      %s91 = ssub.s32 %s15, %s22
      %p92 = scmp.eq.s32.totalorder %s91, 0
      %s94 = sadd.s32 %s93, 1
      %s95 = scalar_select %p92, %s93, %s94
      %p98 = pneg %p92
      %p99 = scmp.eq.s32.totalorder %s15, 1
      %p100 = por %p98, %p99
      %p101 = scmp.ne.s32.totalorder %s93, %s96
      %p102 = scmp.eq.s32.totalorder %s15, 0
      %p103 = por %p101, %p102
      %p104 = scmp.ne.s32.totalorder %s93, %s96
      %p105 = scmp.eq.s32.totalorder %s20, 1
      %p106 = por %p104, %p105
      %p107 = scmp.ne.s32.totalorder %s96, %s97
      %p108 = scmp.eq.s32.totalorder %s20, 0
      %p109 = por %p107, %p108
      %p110 = scmp.ne.s32.totalorder %s96, %s97
      %p111 = scmp.eq.s32.totalorder %s21, 1
      %p112 = por %p110, %p111
      %p114 = scmp.ne.s32.totalorder %s97, %s113
      %p115 = scmp.eq.s32.totalorder %s21, 0
      %p116 = por %p114, %p115
      %p117 = scmp.le.s32.totalorder 1, %s15
      %p118 = scmp.lt.s32.totalorder %s15, 3
      %p119 = pnand %p117, %p118
      %p120 = pneg %p119
      // Predicated region
      $region9: #{tpu_custom_call.1} parent=5 // pred_check
        _
      $region10: #{tpu_custom_call.1} parent=5 // pred_check_branch
        %122 = sbr.rel (%p119) target = $region12
      $region11: #{tpu_custom_call.1} parent=5 // pred_region
        %s123 = ssub.s32 %s15, 1
        // Predicated region
        $region13: #{tpu_custom_call.1} parent=11 // pred_check
          %p124 = pneg %p62
        $region14: #{tpu_custom_call.1} parent=11 // pred_check_branch
          %126 = sbr.rel (%p124) target = $region16
        $region15: #{tpu_custom_call.1} parent=11 // pred_region
          _
        $region16: #{tpu_custom_call.1} parent=11 // pred_fallthru
          _
        // Predicated region
        $region17: #{tpu_custom_call.1} parent=11 // pred_check
          %p127 = pneg %p83
        $region18: #{tpu_custom_call.1} parent=11 // pred_check_branch
          %129 = sbr.rel (%p127) target = $region20
        $region19: #{tpu_custom_call.1} parent=11 // pred_region
          _
        $region20: #{tpu_custom_call.1} parent=11 // pred_fallthru
          _
      $region12: #{tpu_custom_call.1} parent=5 // pred_fallthru
        _
      %p130 = scmp.lt.s32.totalorder %s15, 2
      // Predicated region
      $region21: #{tpu_custom_call.1} parent=5 // pred_check
        %p131 = pneg %p130
      $region22: #{tpu_custom_call.1} parent=5 // pred_check_branch
        %133 = sbr.rel (%p131) target = $region24
      $region23: #{tpu_custom_call.1} parent=5 // pred_region
        // Predicated region
        $region25: #{tpu_custom_call.1} parent=23 // pred_check
          %p134 = pneg %p35
        $region26: #{tpu_custom_call.1} parent=23 // pred_check_branch
          %136 = sbr.rel (%p134) target = $region28
        $region27: #{tpu_custom_call.1} parent=23 // pred_region
          %s137 = sand.u32 %s25, 1
          %s138 = scalar_lea.sflag [#allocation3], %s137
          %s139 = sand.u32 %s25, 1
          %s140 = smul.addr %s139, 64
          %s141 = scalar_lea.vmem [#allocation2], %s140
          %s143 = ssub.s32 1024, 1024
          %144 = vsyncadd %s138, %s143
          %s145 = smul.addr %s15, 8
          %s146 = smul.addr %s145, 128
          %s147 = scalar_lea.hbm %s0, %s146
          %s148 = sshll.u32 %s141, 4
          %s149 = int_to_ptr.vmem [resolvable:$true] %s148
          %154 = dma.hbm_to_vmem [thread:$0]  %s147, 1024, %s149, %s138, 256, 256, 16
        $region28: #{tpu_custom_call.1} parent=23 // pred_fallthru
          _
      $region24: #{tpu_custom_call.1} parent=5 // pred_fallthru
        _
      %p155 = scmp.le.s32.totalorder 1, %s15
      %p156 = scmp.lt.s32.totalorder %s15, 3
      %p157 = pnand %p155, %p156
      %p158 = pneg %p157
      // Predicated region
      $region29: #{tpu_custom_call.1} parent=5 // pred_check
        _
      $region30: #{tpu_custom_call.1} parent=5 // pred_check_branch
        %160 = sbr.rel (%p157) target = $region32
      $region31: #{tpu_custom_call.1} parent=5 // pred_region
        %s161 = ssub.s32 %s15, 1
        %s162 = sand.u32 %s28, 1
        %s163 = scalar_lea.sflag [#allocation3], %s162
        %s164 = sand.u32 %s28, 1
        %s165 = smul.addr %s164, 64
        %s166 = scalar_lea.vmem [#allocation2], %s165
        // Predicated region
        $region33: #{tpu_custom_call.1} parent=31 // pred_check
          %p167 = pneg %p41
        $region34: #{tpu_custom_call.1} parent=31 // pred_check_branch
          %169 = sbr.rel (%p167) target = $region36
        $region35: #{tpu_custom_call.1} parent=31 // pred_region
          %170 = dma.done %s163, 1024
        $region36: #{tpu_custom_call.1} parent=31 // pred_fallthru
          _
        %s171 = sand.u32 %s28, 1
        %s172 = scalar_lea.sflag [#allocation3], %s171
        %s173 = sand.u32 %s28, 1
        %s174 = smul.addr %s173, 64
        %s175 = scalar_lea.vmem [#allocation2], %s174
        %p176 = pneg %p41
        %p177 = pneg %p38
        %p178 = pneg %p62
        %p179 = pneg %p59
        %p180 = pneg %p83
        %p181 = pneg %p80
        %p182 = pneg %p109
        %p183 = pneg %p106
        %s184 = sand.u32 %s96, 1
        %s185 = scalar_lea.sflag [#allocation4], %s184
        %s186 = sand.u32 %s96, 1
        %s187 = smul.addr %s186, 64
        %s188 = scalar_lea.vmem [#allocation5], %s187
        %v189 = vld [vmem:[%s166] sm:$0xff]
        %v190 = vld [vmem:[%s166 + $0x8] sm:$0xff]
        %v191 = vld [vmem:[%s166 + $0x10] sm:$0xff]
        %v192 = vld [vmem:[%s166 + $0x18] sm:$0xff]
        %v193 = vld [vmem:[%s166 + $0x20] sm:$0xff]
        %v194 = vld [vmem:[%s166 + $0x28] sm:$0xff]
        %v195 = vld [vmem:[%s166 + $0x30] sm:$0xff]
        %v196 = vld [vmem:[%s166 + $0x38] sm:$0xff]
        %v197 = vadd.f32 %v189, %v190
        %198 = vadd.xlane.f32.xlu0 %v197
        %v199 = vpop.xlane.xlu0 %198
        %v200 = vadd.f32 %v191, %v192
        %201 = vadd.xlane.f32.xlu0 %v200
        %v202 = vpop.xlane.xlu0 %201
        %v203 = vadd.f32 %v193, %v194
        %204 = vadd.xlane.f32.xlu0 %v203
        %v205 = vpop.xlane.xlu0 %204
        %v206 = vadd.f32 %v195, %v196
        %207 = vadd.xlane.f32.xlu0 %v206
        %v208 = vpop.xlane.xlu0 %207
        %v209 = vadd.f32 %v199, 0.0
        %v210 = vadd.f32 %v202, 0.0
        %v211 = vadd.f32 %v205, 0.0
        %v212 = vadd.f32 %v208, 0.0
        %v213 = vmax.f32 %v189, %v190
        %214 = vmax.xlane.f32.xlu0 %v213
        %v215 = vpop.xlane.xlu0 %214
        %v216 = vmax.f32 %v191, %v192
        %217 = vmax.xlane.f32.xlu0 %v216
        %v218 = vpop.xlane.xlu0 %217
        %v219 = vmax.f32 %v193, %v194
        %220 = vmax.xlane.f32.xlu0 %v219
        %v221 = vpop.xlane.xlu0 %220
        %v222 = vmax.f32 %v195, %v196
        %223 = vmax.xlane.f32.xlu0 %v222
        %v224 = vpop.xlane.xlu0 %223
        %v225 = vmul.f32 %v209, 0.00390625
        %v226 = vmul.f32 %v210, 0.00390625
        %v227 = vmul.f32 %v211, 0.00390625
        %v228 = vmul.f32 %v212, 0.00390625
        %v229 = vld [vmem:[%s1] sm:$0xff]
        %v230 = vld [vmem:[%s1 + $0x8] sm:$0xff]
        %v231 = vld [vmem:[%s1 + $0x10] sm:$0xff]
        %v232 = vld [vmem:[%s1 + $0x18] sm:$0xff]
        %v237 = vlaneseq
        %v238 = vand.u32 %v237, 127
        %v239 = vlaneseq
        %v240 = vshrl.u32 %v239, 7
        %v241 = vsub.s32 %v238, %v240
        %v242 = vrot.slane %v225, %v241
        %v243 = vadd.s32 %v238, 4294967288
        %v244 = vlaneseq
        %v245 = vshrl.u32 %v244, 7
        %v246 = vsub.s32 %v243, %v245
        %v247 = vrot.slane %v226, %v246
        %vm248 = vcmask 130112
        %v249 = vsel %vm248, %v247, %v242
        %v250 = vadd.s32 %v238, 4294967280
        %v251 = vlaneseq
        %v252 = vshrl.u32 %v251, 7
        %v253 = vsub.s32 %v250, %v252
        %v254 = vrot.slane %v227, %v253
        %vm255 = vcmask 195712
        %v256 = vsel %vm255, %v254, %v249
        %v257 = vadd.s32 %v238, 4294967272
        %v258 = vlaneseq
        %v259 = vshrl.u32 %v258, 7
        %v260 = vsub.s32 %v257, %v259
        %v261 = vrot.slane %v228, %v260
        %vm262 = vcmask 261312
        %v263 = vsel %vm262, %v261, %v256
        %vm264 = vcmask 261120
        %v265 = vsel %vm264, %v263, 0
        %267 = vmatprep.subr.mxu0 0.0
        %268 = vmatpush1.msra.mxu0 0.0
        %269 = vmatprep.subr.mxu0 0.0
        %270 = vmatpush1.msra.mxu0 0.0
        %271 = vmatprep.subr.mxu0 0.0
        %272 = vmatpush1.msra.mxu0 0.0
        %273 = vmatprep.subr.mxu0 0.0
        %274 = vmatpush1.msra.mxu0 0.0
        %275 = vmatprep.subr.mxu0 0.0
        %276 = vmatpush1.msra.mxu0 0.0
        %277 = vmatprep.subr.mxu0 0.0
        %278 = vmatpush1.msra.mxu0 0.0
        %279 = vmatprep.subr.mxu0 0.0
        %280 = vmatpush1.msra.mxu0 0.0
        %281 = vmatprep.subr.mxu0 0.0
        %282 = vmatpush1.msra.mxu0 0.0
        %283 = vmatprep.subr.mxu0 0.0
        %284 = vmatpush1.msra.mxu0 0.0
        %285 = vmatprep.subr.mxu0 0.0
        %286 = vmatpush1.msra.mxu0 0.0
        %287 = vmatprep.subr.mxu0 0.0
        %288 = vmatpush1.msra.mxu0 0.0
        %289 = vmatprep.subr.mxu0 0.0
        %290 = vmatpush1.msra.mxu0 0.0
        %291 = vmatprep.subr.mxu0 0.0
        %292 = vmatpush1.msra.mxu0 %v232
        %293 = vmatprep.subr.mxu0 0.0
        %294 = vmatpush1.msra.mxu0 %v231
        %295 = vmatprep.subr.mxu0 0.0
        %296 = vmatpush1.msra.mxu0 %v230
        %297 = vmatprep.subr.mxu0 0.0
        %298 = vmatpush1.msra.mxu0 %v229
        %299 = vmatprep.subr.mxu0 0.0
        %300 = vmatpush2.msra.mxu0 0.0
        %301 = vmatprep.subr.mxu0 0.0
        %302 = vmatpush2.msra.mxu0 0.0
        %303 = vmatprep.subr.mxu0 0.0
        %304 = vmatpush2.msra.mxu0 0.0
        %305 = vmatprep.subr.mxu0 0.0
        %306 = vmatpush2.msra.mxu0 0.0
        %307 = vmatprep.subr.mxu0 0.0
        %308 = vmatpush2.msra.mxu0 0.0
        %309 = vmatprep.subr.mxu0 0.0
        %310 = vmatpush2.msra.mxu0 0.0
        %311 = vmatprep.subr.mxu0 0.0
        %312 = vmatpush2.msra.mxu0 0.0
        %313 = vmatprep.subr.mxu0 0.0
        %314 = vmatpush2.msra.mxu0 0.0
        %315 = vmatprep.subr.mxu0 0.0
        %316 = vmatpush2.msra.mxu0 0.0
        %317 = vmatprep.subr.mxu0 0.0
        %318 = vmatpush2.msra.mxu0 0.0
        %319 = vmatprep.subr.mxu0 0.0
        %320 = vmatpush2.msra.mxu0 0.0
        %321 = vmatprep.subr.mxu0 0.0
        %322 = vmatpush2.msra.mxu0 0.0
        %323 = vmatprep.subr.mxu0 0.0
        %324 = vmatpush2.msra.mxu0 0.0
        %325 = vmatprep.subr.mxu0 0.0
        %326 = vmatpush2.msra.mxu0 0.0
        %327 = vmatprep.subr.mxu0 0.0
        %328 = vmatpush2.msra.mxu0 0.0
        %329 = vmatprep.subr.mxu0 0.0
        %330 = vmatpush2.msra.mxu0 0.0
        %331 = vmatprep.mubr.f32.mxu0 0.0
        %332 = vmatmul.mubr.f32.gmra.mxu0 %v265
        %v333 = vpop.f32.mrf.mxu0
        %v334 = vadd.f32 0.0, %v333
        %v335 = vpop.f32.mrf.mxu0
        %336 = vdwg.mxu0
        %v337 = vmax.f32 %v334, 0.0
        %v342 = vlaneseq
        %v343 = vshrl.u32 %v342, 7
        %v344 = vsub.s32 %v238, %v343
        %v345 = vrot.slane %v215, %v344
        %v346 = vlaneseq
        %v347 = vshrl.u32 %v346, 7
        %v348 = vsub.s32 %v243, %v347
        %v349 = vrot.slane %v218, %v348
        %v350 = vsel %vm248, %v349, %v345
        %v351 = vlaneseq
        %v352 = vshrl.u32 %v351, 7
        %v353 = vsub.s32 %v250, %v352
        %v354 = vrot.slane %v221, %v353
        %v355 = vsel %vm255, %v354, %v350
        %v356 = vlaneseq
        %v357 = vshrl.u32 %v356, 7
        %v358 = vsub.s32 %v257, %v357
        %v359 = vrot.slane %v224, %v358
        %v360 = vsel %vm262, %v359, %v355
        %v361 = vsel %vm264, %v360, 0
        %363 = vmatprep.subr.mxu0 0.0
        %364 = vmatpush1.msra.mxu0 0.0
        %365 = vmatprep.subr.mxu0 0.0
        %366 = vmatpush1.msra.mxu0 0.0
        %367 = vmatprep.subr.mxu0 0.0
        %368 = vmatpush1.msra.mxu0 0.0
        %369 = vmatprep.subr.mxu0 0.0
        %370 = vmatpush1.msra.mxu0 0.0
        %371 = vmatprep.subr.mxu0 0.0
        %372 = vmatpush1.msra.mxu0 0.0
        %373 = vmatprep.subr.mxu0 0.0
        %374 = vmatpush1.msra.mxu0 0.0
        %375 = vmatprep.subr.mxu0 0.0
        %376 = vmatpush1.msra.mxu0 0.0
        %377 = vmatprep.subr.mxu0 0.0
        %378 = vmatpush1.msra.mxu0 0.0
        %379 = vmatprep.subr.mxu0 0.0
        %380 = vmatpush1.msra.mxu0 0.0
        %381 = vmatprep.subr.mxu0 0.0
        %382 = vmatpush1.msra.mxu0 0.0
        %383 = vmatprep.subr.mxu0 0.0
        %384 = vmatpush1.msra.mxu0 0.0
        %385 = vmatprep.subr.mxu0 0.0
        %386 = vmatpush1.msra.mxu0 0.0
        %387 = vmatprep.subr.mxu0 0.0
        %388 = vmatpush1.msra.mxu0 %v232
        %389 = vmatprep.subr.mxu0 0.0
        %390 = vmatpush1.msra.mxu0 %v231
        %391 = vmatprep.subr.mxu0 0.0
        %392 = vmatpush1.msra.mxu0 %v230
        %393 = vmatprep.subr.mxu0 0.0
        %394 = vmatpush1.msra.mxu0 %v229
        %395 = vmatprep.subr.mxu0 0.0
        %396 = vmatpush2.msra.mxu0 0.0
        %397 = vmatprep.subr.mxu0 0.0
        %398 = vmatpush2.msra.mxu0 0.0
        %399 = vmatprep.subr.mxu0 0.0
        %400 = vmatpush2.msra.mxu0 0.0
        %401 = vmatprep.subr.mxu0 0.0
        %402 = vmatpush2.msra.mxu0 0.0
        %403 = vmatprep.subr.mxu0 0.0
        %404 = vmatpush2.msra.mxu0 0.0
        %405 = vmatprep.subr.mxu0 0.0
        %406 = vmatpush2.msra.mxu0 0.0
        %407 = vmatprep.subr.mxu0 0.0
        %408 = vmatpush2.msra.mxu0 0.0
        %409 = vmatprep.subr.mxu0 0.0
        %410 = vmatpush2.msra.mxu0 0.0
        %411 = vmatprep.subr.mxu0 0.0
        %412 = vmatpush2.msra.mxu0 0.0
        %413 = vmatprep.subr.mxu0 0.0
        %414 = vmatpush2.msra.mxu0 0.0
        %415 = vmatprep.subr.mxu0 0.0
        %416 = vmatpush2.msra.mxu0 0.0
        %417 = vmatprep.subr.mxu0 0.0
        %418 = vmatpush2.msra.mxu0 0.0
        %419 = vmatprep.subr.mxu0 0.0
        %420 = vmatpush2.msra.mxu0 0.0
        %421 = vmatprep.subr.mxu0 0.0
        %422 = vmatpush2.msra.mxu0 0.0
        %423 = vmatprep.subr.mxu0 0.0
        %424 = vmatpush2.msra.mxu0 0.0
        %425 = vmatprep.subr.mxu0 0.0
        %426 = vmatpush2.msra.mxu0 0.0
        %427 = vmatprep.mubr.f32.mxu0 0.0
        %428 = vmatmul.mubr.f32.gmra.mxu0 %v361
        %v429 = vpop.f32.mrf.mxu0
        %v430 = vadd.f32 0.0, %v429
        %v431 = vpop.f32.mrf.mxu0
        %432 = vdwg.mxu0
        %v433 = vmax.f32 %v430, 0.0
        %v434 = vadd.f32 %v337, %v433
        %v435 = vld [vmem:[%s2] sm:$0xf]
        %vm436 = vcmask 31744
        %v438 = vsel %vm436, %v434, 0
        %vm440 = vcmask 1043456
        %v442 = vsel %vm440, %v435, 0
        %444 = vmatprep.subr.mxu0 0.0
        %445 = vmatpush1.msra.mxu0 0.0
        %446 = vmatprep.subr.mxu0 0.0
        %447 = vmatpush1.msra.mxu0 0.0
        %448 = vmatprep.subr.mxu0 0.0
        %449 = vmatpush1.msra.mxu0 0.0
        %450 = vmatprep.subr.mxu0 0.0
        %451 = vmatpush1.msra.mxu0 0.0
        %452 = vmatprep.subr.mxu0 0.0
        %453 = vmatpush1.msra.mxu0 0.0
        %454 = vmatprep.subr.mxu0 0.0
        %455 = vmatpush1.msra.mxu0 0.0
        %456 = vmatprep.subr.mxu0 0.0
        %457 = vmatpush1.msra.mxu0 0.0
        %458 = vmatprep.subr.mxu0 0.0
        %459 = vmatpush1.msra.mxu0 0.0
        %460 = vmatprep.subr.mxu0 0.0
        %461 = vmatpush1.msra.mxu0 0.0
        %462 = vmatprep.subr.mxu0 0.0
        %463 = vmatpush1.msra.mxu0 0.0
        %464 = vmatprep.subr.mxu0 0.0
        %465 = vmatpush1.msra.mxu0 0.0
        %466 = vmatprep.subr.mxu0 0.0
        %467 = vmatpush1.msra.mxu0 0.0
        %468 = vmatprep.subr.mxu0 0.0
        %469 = vmatpush1.msra.mxu0 0.0
        %470 = vmatprep.subr.mxu0 0.0
        %471 = vmatpush1.msra.mxu0 0.0
        %472 = vmatprep.subr.mxu0 0.0
        %473 = vmatpush1.msra.mxu0 0.0
        %474 = vmatprep.subr.mxu0 0.0
        %475 = vmatpush1.msra.mxu0 %v442
        %476 = vmatprep.subr.mxu0 0.0
        %477 = vmatpush2.msra.mxu0 0.0
        %478 = vmatprep.subr.mxu0 0.0
        %479 = vmatpush2.msra.mxu0 0.0
        %480 = vmatprep.subr.mxu0 0.0
        %481 = vmatpush2.msra.mxu0 0.0
        %482 = vmatprep.subr.mxu0 0.0
        %483 = vmatpush2.msra.mxu0 0.0
        %484 = vmatprep.subr.mxu0 0.0
        %485 = vmatpush2.msra.mxu0 0.0
        %486 = vmatprep.subr.mxu0 0.0
        %487 = vmatpush2.msra.mxu0 0.0
        %488 = vmatprep.subr.mxu0 0.0
        %489 = vmatpush2.msra.mxu0 0.0
        %490 = vmatprep.subr.mxu0 0.0
        %491 = vmatpush2.msra.mxu0 0.0
        %492 = vmatprep.subr.mxu0 0.0
        %493 = vmatpush2.msra.mxu0 0.0
        %494 = vmatprep.subr.mxu0 0.0
        %495 = vmatpush2.msra.mxu0 0.0
        %496 = vmatprep.subr.mxu0 0.0
        %497 = vmatpush2.msra.mxu0 0.0
        %498 = vmatprep.subr.mxu0 0.0
        %499 = vmatpush2.msra.mxu0 0.0
        %500 = vmatprep.subr.mxu0 0.0
        %501 = vmatpush2.msra.mxu0 0.0
        %502 = vmatprep.subr.mxu0 0.0
        %503 = vmatpush2.msra.mxu0 0.0
        %504 = vmatprep.subr.mxu0 0.0
        %505 = vmatpush2.msra.mxu0 0.0
        %506 = vmatprep.subr.mxu0 0.0
        %507 = vmatpush2.msra.mxu0 0.0
        %508 = vmatprep.mubr.f32.mxu0 0.0
        %509 = vmatmul.mubr.f32.gmra.mxu0 %v438
        %v510 = vpop.f32.mrf.mxu0
        %v511 = vadd.f32 0.0, %v510
        %v512 = vpop.f32.mrf.mxu0
        %513 = vdwg.mxu0
        %v514 = vxor.u32 %v511, 2147483648
        %v515 = vmul.f32 %v514, 1.442695
        %v516 = vpow.pop %v515
        %v517 = vadd.f32 %v516, 1.0
        %v518 = vrcp.pop %v517
        %v519 = vmul.f32 1.0, %v518
        %v520 = vlaneseq
        %v521 = vshrl.u32 %v520, 7
        %v522 = vsub.s32 0, %v521
        %v523 = vrot.slane %v519, %v522
        %525 = vbcast.lane.b32.xlu0 %v523, 256
        %v526 = vpop.permute.xlu0 %525
        %s528 = sor.u32 256, 8
        %529 = vbcast.lane.b32.xlu0 %v523, %s528
        %v530 = vpop.permute.xlu0 %529
        %s532 = sor.u32 256, 16
        %533 = vbcast.lane.b32.xlu0 %v523, %s532
        %v534 = vpop.permute.xlu0 %533
        %s536 = sor.u32 256, 24
        %537 = vbcast.lane.b32.xlu0 %v523, %s536
        %v538 = vpop.permute.xlu0 %537
        %v539 = vmul.f32 %v189, %v526
        %v540 = vmul.f32 %v190, %v526
        %v541 = vmul.f32 %v191, %v530
        %v542 = vmul.f32 %v192, %v530
        %v543 = vmul.f32 %v193, %v534
        %v544 = vmul.f32 %v194, %v534
        %v545 = vmul.f32 %v195, %v538
        %v546 = vmul.f32 %v196, %v538
        %547 = vst [vmem:[%s188] sm:$0xff] %v539
        %548 = vst [vmem:[%s188 + $0x8] sm:$0xff] %v540
        %549 = vst [vmem:[%s188 + $0x10] sm:$0xff] %v541
        %550 = vst [vmem:[%s188 + $0x18] sm:$0xff] %v542
        %551 = vst [vmem:[%s188 + $0x20] sm:$0xff] %v543
        %552 = vst [vmem:[%s188 + $0x28] sm:$0xff] %v544
        %553 = vst [vmem:[%s188 + $0x30] sm:$0xff] %v545
        %554 = vst [vmem:[%s188 + $0x38] sm:$0xff] %v546
        %s555 = sand.u32 %s96, 1
        %s556 = scalar_lea.sflag [#allocation4], %s555
        %s557 = sand.u32 %s96, 1
        %s558 = smul.addr %s557, 64
        %s559 = scalar_lea.vmem [#allocation5], %s558
        // Predicated region
        $region37: #{tpu_custom_call.1} parent=31 // pred_check
          %p560 = pneg %p106
        $region38: #{tpu_custom_call.1} parent=31 // pred_check_branch
          %562 = sbr.rel (%p560) target = $region40
        $region39: #{tpu_custom_call.1} parent=31 // pred_region
          %s564 = ssub.s32 1024, 1024
          %565 = vsyncadd %s556, %s564
          %s566 = smul.addr %s20, 8
          %s567 = smul.addr %s566, 128
          %s568 = scalar_lea.hbm %s3, %s567
          %s569 = sshll.u32 %s559, 4
          %s570 = int_to_ptr.vmem [resolvable:$true] %s569
          %575 = dma.vmem_to_hbm [thread:$0]  %s570, 1024, %s568, %s556, 256, 256, 16
        $region40: #{tpu_custom_call.1} parent=31 // pred_fallthru
          _
      $region32: #{tpu_custom_call.1} parent=5 // pred_fallthru
        _
      %p576 = scmp.le.s32.totalorder 2, %s15
      // Predicated region
      $region41: #{tpu_custom_call.1} parent=5 // pred_check
        %p577 = pneg %p576
      $region42: #{tpu_custom_call.1} parent=5 // pred_check_branch
        %579 = sbr.rel (%p577) target = $region44
      $region43: #{tpu_custom_call.1} parent=5 // pred_region
        %s580 = ssub.s32 %s15, 2
        // Predicated region
        $region45: #{tpu_custom_call.1} parent=43 // pred_check
          %p581 = pneg %p112
        $region46: #{tpu_custom_call.1} parent=43 // pred_check_branch
          %583 = sbr.rel (%p581) target = $region48
        $region47: #{tpu_custom_call.1} parent=43 // pred_region
          %s584 = sand.u32 %s97, 1
          %s585 = scalar_lea.sflag [#allocation4], %s584
          %s586 = sand.u32 %s97, 1
          %s587 = smul.addr %s586, 64
          %s588 = scalar_lea.vmem [#allocation5], %s587
          %589 = dma.done %s585, 1024
        $region48: #{tpu_custom_call.1} parent=43 // pred_fallthru
          _
      $region44: #{tpu_custom_call.1} parent=5 // pred_fallthru
        _
    $region6: #{tpu_custom_call.1} parent=1 // loop_footer
      %s19 = sadd.s32 1, %s15
    $region7: #{tpu_custom_call.1} parent=1 // loop_footer_branch
      %14 = sbr.rel target = $region3
    $region8: #{tpu_custom_call.1} parent=1 // loop_exit
      _
    %590 = vsyncpa [#allocation3], 1
    %s591 = scalar_lea.sflag [#allocation3], 1
    %592 = vsyncpa %s591, 1
    %593 = vsyncpa [#allocation4], 1
    %s594 = scalar_lea.sflag [#allocation4], 1
    %595 = vsyncpa %s594, 1

</llo_original>
